<compile_context>
chip_gen: v7x
topology: tpu7x:2x2x1
jax: 0.10.0
libtpu: 0.0.40
codegen_flags: <defaults>
</compile_context>

<pallas_src>
import jax
import jax.numpy as jnp
from jax.experimental import pallas as pl
from jax.experimental.pallas import tpu as pltpu


_LANE = 128
_SUBLANE = 8
_MAX_LANE_TILE = 2048                  # lane-tile cap (multiple of 128)
_TARGET_BLOCK_BYTES = 1 << 20          # ~1 MiB per data block per stream


def _exchange_kernel(m1_ref, m2_ref, x0_ref, x1_ref, y1_ref, y2_ref):
    # Masks are (tm, 1) int32 -> broadcast over the lane axis for free.
    m1 = m1_ref[...] != 0
    m2 = m2_ref[...] != 0
    x0 = x0_ref[...]
    x1 = x1_ref[...]
    y1_ref[...] = jnp.where(m1, x0, x1)
    y2_ref[...] = jnp.where(m2, x1, x0)


def _pick_tile(total, unit, cap):
    """Largest tile <= cap that is a multiple of `unit`, or the full extent."""
    if total <= unit:
        return total                   # full extent is always a legal block dim
    t = min(cap, total)
    return max(unit, (t // unit) * unit)


def exchange_pallas(x0_nchw, x1_nchw, gamma1, gamma2, bn_threshold):
    """x0_nchw, x1_nchw: (N, C, H, W). gamma1/gamma2: (C,). Returns [y1, y2] NCHW."""
    N, C, H, W = x0_nchw.shape
    dtype = x0_nchw.dtype
    rows = N * C
    cols = H * W

    # Free reshape views of NCHW (no data movement).
    x0 = x0_nchw.reshape(rows, cols)
    x1 = x1_nchw.reshape(rows, cols)

    # Hoist the mask computation out of the kernel: per-row (channel) mask,
    # bn_threshold stays a host-side constant (no SMEM operand).
    thr = jnp.float32(bn_threshold)
    m1 = jnp.abs(gamma1.astype(jnp.float32)) >= thr
    m2 = jnp.abs(gamma2.astype(jnp.float32)) >= thr
    m1_rows = jnp.tile(m1, N).reshape(rows, 1).astype(jnp.int32)   # row r -> channel r % C
    m2_rows = jnp.tile(m2, N).reshape(rows, 1).astype(jnp.int32)

    # Tile sizing: lane-dense last dim, ~1 MiB blocks.
    # 4 data streams x 2 buffers x ~1 MiB ~= 8 MiB  -> fits v5e's 16 MiB scoped
    # default, v6e/v7x 32 MiB, with plenty of headroom.
    itemsize = jnp.dtype(dtype).itemsize
    tl = _pick_tile(cols, _LANE, _MAX_LANE_TILE)
    tm_cap = max(_SUBLANE,
                 (_TARGET_BLOCK_BYTES // (tl * itemsize)) // _SUBLANE * _SUBLANE)
    tm = _pick_tile(rows, _SUBLANE, tm_cap)

    grid = (pl.cdiv(rows, tm), pl.cdiv(cols, tl))   # partial edge blocks are padded/masked
    data_spec = pl.BlockSpec((tm, tl), lambda i, j: (i, j))
    mask_spec = pl.BlockSpec((tm, 1), lambda i, j: (i, 0))

    y1, y2 = pl.pallas_call(
        _exchange_kernel,
        out_shape=(
            jax.ShapeDtypeStruct((rows, cols), dtype),
            jax.ShapeDtypeStruct((rows, cols), dtype),
        ),
        grid_spec=pltpu.PrefetchScalarGridSpec(
            num_scalar_prefetch=0,
            grid=grid,
            in_specs=[mask_spec, mask_spec, data_spec, data_spec],
            out_specs=[data_spec, data_spec],
        ),
        compiler_params=pltpu.CompilerParams(
            # Both axes fully parallel -> shards across v7x's 2 TensorCores;
            # neutral on v5e/v6e.
            dimension_semantics=("parallel", "parallel"),
            vmem_limit_bytes=32 * 1024 * 1024,
        ),
    )(m1_rows, m2_rows, x0, x1)

    # Free reshapes back to NCHW.
    return [y1.reshape(N, C, H, W), y2.reshape(N, C, H, W)]


def exchange_ref(x0, x1, gamma1, gamma2, thr):
    """Pure-JAX reference mirroring the PyTorch forward (NCHW)."""
    m1 = (jnp.abs(gamma1) >= thr)[None, :, None, None]
    m2 = (jnp.abs(gamma2) >= thr)[None, :, None, None]
    y1 = jnp.where(m1, x0, x1)
    y2 = jnp.where(m2, x1, x0)
    return [y1, y2]


if __name__ == "__main__":
    key = jax.random.PRNGKey(0)
    k0, k1, kg1, kg2 = jax.random.split(key, 4)

    N, C, H, W = 2, 4, 16, 16
    x0 = jax.random.normal(k0, (N, C, H, W), dtype=jnp.float32)
    x1 = jax.random.normal(k1, (N, C, H, W), dtype=jnp.float32)

    # BatchNorm weight (gamma) parameters, initialized deterministically.
    gamma1 = jax.random.normal(kg1, (C,), dtype=jnp.float32)
    gamma2 = jax.random.normal(kg2, (C,), dtype=jnp.float32)
    bn_threshold = 0.5

    y1, y2 = exchange_pallas(x0, x1, gamma1, gamma2, bn_threshold)
    jax.block_until_ready(y1)
    jax.block_until_ready(y2)

    r1, r2 = exchange_ref(x0, x1, gamma1, gamma2, bn_threshold)
    assert jnp.array_equal(y1, r1), "y1 mismatch vs reference"
    assert jnp.array_equal(y2, r2), "y2 mismatch vs reference"

    print("KERNEL_OK")
</pallas_src>

<mosaic_0001>
module attributes {stable_mosaic.version = 11 : i64} {
  func.func @_exchange_kernel(%arg0: i32, %arg1: i32, %arg2: memref<8x1xi32, #tpu.memory_space<vmem>>, %arg3: memref<8x1xi32, #tpu.memory_space<vmem>>, %arg4: memref<8x256xf32, #tpu.memory_space<vmem>>, %arg5: memref<8x256xf32, #tpu.memory_space<vmem>>, %arg6: memref<8x256xf32, #tpu.memory_space<vmem>>, %arg7: memref<8x256xf32, #tpu.memory_space<vmem>>) attributes {dimension_semantics = [#tpu.dimension_semantics<parallel>, #tpu.dimension_semantics<parallel>], iteration_bounds = array<i64: 1, 1>, scalar_prefetch = 0 : i64, scratch_operands = 0 : i64, tpu.core_type = #tpu.core_type<tc>, window_params = [{transform_indices = @transform_0, window_bounds = array<i64: 8, 1>}, {transform_indices = @transform_1, window_bounds = array<i64: 8, 1>}, {transform_indices = @transform_2, window_bounds = array<i64: 8, 256>}, {transform_indices = @transform_3, window_bounds = array<i64: 8, 256>}, {transform_indices = @transform_4, window_bounds = array<i64: 8, 256>}, {transform_indices = @transform_5, window_bounds = array<i64: 8, 256>}]} {
    %c0 = arith.constant 0 : index
    %c0_0 = arith.constant 0 : index
    %0 = vector.load %arg2[%c0, %c0_0] : memref<8x1xi32, #tpu.memory_space<vmem>>, vector<8x1xi32>
    %c0_i32 = arith.constant 0 : i32
    %1 = vector.broadcast %c0_i32 : i32 to vector<8x1xi32>
    %2 = arith.cmpi ne, %0, %1 : vector<8x1xi32>
    %c0_1 = arith.constant 0 : index
    %c0_2 = arith.constant 0 : index
    %3 = vector.load %arg3[%c0_1, %c0_2] : memref<8x1xi32, #tpu.memory_space<vmem>>, vector<8x1xi32>
    %c0_i32_3 = arith.constant 0 : i32
    %4 = vector.broadcast %c0_i32_3 : i32 to vector<8x1xi32>
    %5 = arith.cmpi ne, %3, %4 : vector<8x1xi32>
    %c0_4 = arith.constant 0 : index
    %c0_5 = arith.constant 0 : index
    %6 = vector.load %arg4[%c0_4, %c0_5] : memref<8x256xf32, #tpu.memory_space<vmem>>, vector<8x256xf32>
    %c0_6 = arith.constant 0 : index
    %c0_7 = arith.constant 0 : index
    %7 = vector.load %arg5[%c0_6, %c0_7] : memref<8x256xf32, #tpu.memory_space<vmem>>, vector<8x256xf32>
    %8 = vector.shape_cast %2 : vector<8x1xi1> to vector<8x1xi1>
    %9 = vector.broadcast %8 : vector<8x1xi1> to vector<8x256xi1>
    %10 = arith.select %9, %6, %7 : vector<8x256xi1>, vector<8x256xf32>
    %c0_8 = arith.constant 0 : index
    %c0_9 = arith.constant 0 : index
    %11 = vector.load %arg6[%c0_8, %c0_9] : memref<8x256xf32, #tpu.memory_space<vmem>>, vector<8x256xf32>
    tpu.vector_store %arg6[%c0_8, %c0_9], %10 {strides = array<i32>} : memref<8x256xf32, #tpu.memory_space<vmem>>, vector<8x256xf32>,
    %12 = vector.shape_cast %5 : vector<8x1xi1> to vector<8x1xi1>
    %13 = vector.broadcast %12 : vector<8x1xi1> to vector<8x256xi1>
    %14 = arith.select %13, %7, %6 : vector<8x256xi1>, vector<8x256xf32>
    %c0_10 = arith.constant 0 : index
    %c0_11 = arith.constant 0 : index
    %15 = vector.load %arg7[%c0_10, %c0_11] : memref<8x256xf32, #tpu.memory_space<vmem>>, vector<8x256xf32>
    tpu.vector_store %arg7[%c0_10, %c0_11], %14 {strides = array<i32>} : memref<8x256xf32, #tpu.memory_space<vmem>>, vector<8x256xf32>,
    return
  }
  func.func @transform_0(%arg0: i32, %arg1: i32) -> (i32, i32) {
    %c0_i32 = arith.constant 0 : i32
    %c0_i32_0 = arith.constant 0 : i32
    return %arg0, %c0_i32 : i32, i32
  }
  func.func @transform_1(%arg0: i32, %arg1: i32) -> (i32, i32) {
    %c0_i32 = arith.constant 0 : i32
    %c0_i32_0 = arith.constant 0 : i32
    return %arg0, %c0_i32 : i32, i32
  }
  func.func @transform_2(%arg0: i32, %arg1: i32) -> (i32, i32) {
    %c0_i32 = arith.constant 0 : i32
    return %arg0, %arg1 : i32, i32
  }
  func.func @transform_3(%arg0: i32, %arg1: i32) -> (i32, i32) {
    %c0_i32 = arith.constant 0 : i32
    return %arg0, %arg1 : i32, i32
  }
  func.func @transform_4(%arg0: i32, %arg1: i32) -> (i32, i32) {
    %c0_i32 = arith.constant 0 : i32
    return %arg0, %arg1 : i32, i32
  }
  func.func @transform_5(%arg0: i32, %arg1: i32) -> (i32, i32) {
    %c0_i32 = arith.constant 0 : i32
    return %arg0, %arg1 : i32, i32
  }
}

</mosaic_0001>

<llo_original>
// kernel: tpu_custom_call.1
$region0: #{tpu_custom_call.1}
  #allocation0 [shape = 'u32[]', space=smem, size = 0x4, offset = 0x4, fixed_abs, tag = 'smem constant byte address 0x4 - core index']
  #allocation1 [shape = 'u32[144,128]{1,0:T(1,128)}', space=vmem, size = 0x12000, scoped, tag = 'internal scratch']
  %s0 = inlined_call_operand.vmem [shape: s32[8,1], index: 0, kind: input, shape index: {}]
  %s1 = inlined_call_operand.vmem [shape: s32[8,1], index: 1, kind: input, shape index: {}]
  %s2 = inlined_call_operand.vmem [shape: f32[8,256], index: 2, kind: input, shape index: {}]
  %s3 = inlined_call_operand.hbm [shape: f32[8,256], index: 3, kind: input, shape index: {}]
  %s4 = inlined_call_operand.hbm [shape: f32[8,256], index: 4, kind: output, shape index: {0}]
  %s5 = inlined_call_operand.hbm [shape: f32[8,256], index: 5, kind: output, shape index: {1}]
  %6 = xla_tuple %s4, %s5
  %s7 = sld [smem:[#allocation0]]
  $region38: #{tpu_custom_call.1} parent=0
    _
  %s9 = ssub.s32 1, %s7
  %s10 = scalar_select 0, %s9, %s7
  $region1: #{tpu_custom_call.1} parent=0
    #allocation2 [shape = 'u8[8192]{0}', space=vmem, size = 0x2000, scoped, tag = 'input window, operand 3, single buffered']
    #allocation3 [shape = 's32[1]{0}', space=sflag, size = 0x4, scoped, tag = 'scoped memory for tpu_custom_call.1']
    #allocation4 [shape = 's32[1]{0}', space=sflag, size = 0x4, scoped, tag = 'scoped memory for tpu_custom_call.1']
    #allocation5 [shape = 'u8[8192]{0}', space=vmem, size = 0x2000, scoped, tag = 'output window, operand 0, single buffered']
    #allocation6 [shape = 'u8[8192]{0}', space=vmem, size = 0x2000, scoped, tag = 'output window, operand 1, single buffered']
    #allocation7 [shape = 's32[1]{0}', space=sflag, size = 0x4, scoped, tag = 'scoped memory for tpu_custom_call.1']
    %11 = vsyncpa [#allocation3], 0
    %12 = vsyncpa [#allocation4], 0
    %13 = vsyncpa [#allocation7], 0
    // Predicated region
    $region2: #{tpu_custom_call.1} parent=1 // pred_check
      _
    $region3: #{tpu_custom_call.1} parent=1 // pred_check_branch
      %15 = sbr.rel (0) target = $region5
    $region4: #{tpu_custom_call.1} parent=1 // pred_region
      _
    $region5: #{tpu_custom_call.1} parent=1 // pred_fallthru
      _
    // Predicated region
    $region6: #{tpu_custom_call.1} parent=1 // pred_check
      _
    $region7: #{tpu_custom_call.1} parent=1 // pred_check_branch
      %17 = sbr.rel (0) target = $region9
    $region8: #{tpu_custom_call.1} parent=1 // pred_region
      _
    $region9: #{tpu_custom_call.1} parent=1 // pred_fallthru
      _
    // Predicated region
    $region10: #{tpu_custom_call.1} parent=1 // pred_check
      _
    $region11: #{tpu_custom_call.1} parent=1 // pred_check_branch
      %19 = sbr.rel (0) target = $region13
    $region12: #{tpu_custom_call.1} parent=1 // pred_region
      _
    $region13: #{tpu_custom_call.1} parent=1 // pred_fallthru
      _
    // Predicated region
    $region14: #{tpu_custom_call.1} parent=1 // pred_check
      _
    $region15: #{tpu_custom_call.1} parent=1 // pred_check_branch
      %21 = sbr.rel (0) target = $region17
    $region16: #{tpu_custom_call.1} parent=1 // pred_region
      %s23 = ssub.s32 256, 256
      %24 = vsyncadd [#allocation3], %s23
      %s26 = sshll.u32 [#allocation2], 4
      %s27 = int_to_ptr.vmem [resolvable:$true] %s26
      %29 = dma.hbm_to_vmem [thread:$0]  %s3, 256, %s27, [#allocation3]
    $region17: #{tpu_custom_call.1} parent=1 // pred_fallthru
      _
    // Predicated region
    $region18: #{tpu_custom_call.1} parent=1 // pred_check
      _
    $region19: #{tpu_custom_call.1} parent=1 // pred_check_branch
      %31 = sbr.rel (0) target = $region21
    $region20: #{tpu_custom_call.1} parent=1 // pred_region
      %32 = dma.done [#allocation3], 256
    $region21: #{tpu_custom_call.1} parent=1 // pred_fallthru
      _
    %v33 = vld [vmem:[%s0] sm:$0xff]
    %vm34 = vcmp.ne.s32.totalorder %v33, 0
    %v35 = vld [vmem:[%s1] sm:$0xff]
    %vm36 = vcmp.ne.s32.totalorder %v35, 0
    %v37 = vld [vmem:[%s2] sm:$0xff]
    %v38 = vld [vmem:[%s2 + $0x8] sm:$0xff]
    %v39 = vld [vmem:[#allocation2] sm:$0xff]
    %v40 = vld [vmem:[#allocation2 + $0x8] sm:$0xff]
    %v41 = vsel %vm34, 1, 0
    %42 = vset.pattern.permute.xlu0 0
    %43 = vperm.xlu0 %42, %v41
    %v44 = vpop.permute.xlu0 %43
    %vm45 = vcmp.eq.s32.totalorder %v44, 1
    %v46 = vsel %vm45, %v37, %v39
    %v47 = vsel %vm45, %v38, %v40
    %48 = vst [vmem:[#allocation5] sm:$0xff] %v46
    %49 = vst [vmem:[#allocation5 + $0x8] sm:$0xff] %v47
    %v50 = vsel %vm36, 1, 0
    %51 = vset.pattern.permute.xlu0 0
    %52 = vperm.xlu0 %51, %v50
    %v53 = vpop.permute.xlu0 %52
    %vm54 = vcmp.eq.s32.totalorder %v53, 1
    %v55 = vsel %vm54, %v39, %v37
    %v56 = vsel %vm54, %v40, %v38
    %57 = vst [vmem:[#allocation6] sm:$0xff] %v55
    %58 = vst [vmem:[#allocation6 + $0x8] sm:$0xff] %v56
    // Predicated region
    $region22: #{tpu_custom_call.1} parent=1 // pred_check
      _
    $region23: #{tpu_custom_call.1} parent=1 // pred_check_branch
      %60 = sbr.rel (0) target = $region25
    $region24: #{tpu_custom_call.1} parent=1 // pred_region
      %s62 = ssub.s32 256, 256
      %63 = vsyncadd [#allocation4], %s62
      %s65 = sshll.u32 [#allocation5], 4
      %s66 = int_to_ptr.vmem [resolvable:$true] %s65
      %68 = dma.vmem_to_hbm [thread:$0]  %s66, 256, %s4, [#allocation4]
    $region25: #{tpu_custom_call.1} parent=1 // pred_fallthru
      _
    // Predicated region
    $region26: #{tpu_custom_call.1} parent=1 // pred_check
      _
    $region27: #{tpu_custom_call.1} parent=1 // pred_check_branch
      %70 = sbr.rel (0) target = $region29
    $region28: #{tpu_custom_call.1} parent=1 // pred_region
      %s72 = ssub.s32 256, 256
      %73 = vsyncadd [#allocation7], %s72
      %s75 = sshll.u32 [#allocation6], 4
      %s76 = int_to_ptr.vmem [resolvable:$true] %s75
      %78 = dma.vmem_to_hbm [thread:$0]  %s76, 256, %s5, [#allocation7]
    $region29: #{tpu_custom_call.1} parent=1 // pred_fallthru
      _
    // Predicated region
    $region30: #{tpu_custom_call.1} parent=1 // pred_check
      _
    $region31: #{tpu_custom_call.1} parent=1 // pred_check_branch
      %80 = sbr.rel (0) target = $region33
    $region32: #{tpu_custom_call.1} parent=1 // pred_region
      %81 = dma.done [#allocation4], 256
    $region33: #{tpu_custom_call.1} parent=1 // pred_fallthru
      _
    // Predicated region
    $region34: #{tpu_custom_call.1} parent=1 // pred_check
      _
    $region35: #{tpu_custom_call.1} parent=1 // pred_check_branch
      %83 = sbr.rel (0) target = $region37
    $region36: #{tpu_custom_call.1} parent=1 // pred_region
      %84 = dma.done [#allocation7], 256
    $region37: #{tpu_custom_call.1} parent=1 // pred_fallthru
      _
    %85 = vsyncpa [#allocation3], 1
    %86 = vsyncpa [#allocation4], 1
    %87 = vsyncpa [#allocation7], 1

</llo_original>
